<compile_context>
chip_gen: v7x
topology: tpu7x:2x2x1
jax: 0.10.0
libtpu: 0.0.40
codegen_flags: <defaults>
</compile_context>

<pallas_src>
import jax
import jax.numpy as jnp
from jax.experimental import pallas as pl
from jax.experimental.pallas import tpu as pltpu


def _round_up(x, m):
    return ((x + m - 1) // m) * m


def _critic_kernel(
    x_ref,                         # (TM, H)  f32   token tile (pipelined)
    w1c_ref, b1c_ref,              # (H, 2H) bf16, (1, 2H) f32  fused layer-1 [value | q]
    w2v_ref, b2v_ref,              # (H, H)  bf16, (1, H)  f32
    w2q_ref, b2q_ref,              # (H, H)  bf16, (1, H)  f32
    w3v_ref, b3v_ref,              # (H, 1)  bf16, (1, 1)  f32
    w3q_ref, b3q_ref,              # (H, 1)  bf16, (1, 1)  f32
    val_ref, qval_ref,             # (TM, 1) f32 each
):
    h = w2v_ref.shape[0]           # hidden_dim (static)
    mm_dtype = w1c_ref.dtype       # bf16 matmul operand dtype

    # ---- layer 1: both heads fused into one (TM,H)x(H,2H) bf16 MXU matmul --
    xb = x_ref[...].astype(mm_dtype)
    h1 = jnp.dot(xb, w1c_ref[...], preferred_element_type=jnp.float32)
    h1 = jnp.maximum(h1 + b1c_ref[...], 0.0)            # f32 bias+ReLU (VPU)
    h1b = h1.astype(mm_dtype)
    # NOTE: these slices are free only when H % 128 == 0; otherwise a small
    # lane-masked copy is materialized (negligible vs. the layer-2 matmuls).
    h1v = h1b[:, :h]
    h1q = h1b[:, h:]

    # ---- layer 2: one bf16 matmul per head (heads have different inputs) ---
    h2v = jnp.maximum(
        jnp.dot(h1v, w2v_ref[...], preferred_element_type=jnp.float32)
        + b2v_ref[...], 0.0)                             # (TM, H) f32
    h2q = jnp.maximum(
        jnp.dot(h1q, w2q_ref[...], preferred_element_type=jnp.float32)
        + b2q_ref[...], 0.0)                             # (TM, H) f32

    # ---- layer 3: natural (TM,H)@(H,1) matmuls, no activation transpose ----
    # (fusing both heads here would require concatenating h2v/h2q in VMEM,
    #  which costs more than the second tiny MXU push it would save)
    val = jnp.dot(h2v.astype(mm_dtype), w3v_ref[...],
                  preferred_element_type=jnp.float32) + b3v_ref[...]
    qval = jnp.dot(h2q.astype(mm_dtype), w3q_ref[...],
                   preferred_element_type=jnp.float32) + b3q_ref[...]

    val_ref[...] = val
    qval_ref[...] = qval


def prepare_critic_params(params, matmul_dtype=jnp.bfloat16):
    """One-time parameter prep (call OUTSIDE the per-step jit):
    fuse the two heads' layer-1 weights/biases and cast matmul weights to the
    MXU-native dtype. Biases stay f32 (bias+ReLU is done in f32)."""
    mm = matmul_dtype
    return {
        "w1c": jnp.concatenate([params["v_w1"], params["q_w1"]], axis=1).astype(mm),
        "b1c": jnp.concatenate([params["v_b1"], params["q_b1"]], axis=1).astype(jnp.float32),
        "w2v": params["v_w2"].astype(mm), "b2v": params["v_b2"].astype(jnp.float32),
        "w2q": params["q_w2"].astype(mm), "b2q": params["q_b2"].astype(jnp.float32),
        "w3v": params["v_w3"].astype(mm), "b3v": params["v_b3"].astype(jnp.float32),
        "w3q": params["q_w3"].astype(mm), "b3q": params["q_b3"].astype(jnp.float32),
    }


def critic_forward(hidden_states, prep, *, tile_m=512):
    """JAX wrapper reproducing Critic.forward.

    Args:
      hidden_states: (batch, seq_len, hidden_dim) float32
      prep: prepared params from prepare_critic_params()
    Returns:
      (values, q_values): each (batch, seq_len) float32
    """
    b, s, h = hidden_states.shape
    m = b * s
    x = hidden_states.reshape(m, h)

    # MXU-aligned token tile (multiple of 128 when there is enough work);
    # no input padding — partial final blocks are handled by the pipeline and
    # their out-of-bounds output rows are dropped.
    if m >= 128:
        tile_m = _round_up(max(128, min(tile_m, _round_up(m, 128))), 128)
    else:
        tile_m = m
    num_tiles = (m + tile_m - 1) // tile_m

    weight_bytes = sum(int(v.size) * v.dtype.itemsize for v in prep.values())
    x_tile_bytes = 4 * tile_m * h            # f32, double-buffered by pipeline
    out_tile_bytes = 4 * tile_m              # per head, per buffer
    act_bytes = 4 * tile_m * h * 10          # h1(2H) + bf16 copies + h2v/h2q (generous)
    vmem_need = weight_bytes + 2 * x_tile_bytes + 4 * out_tile_bytes + act_bytes

    try:
        vmem_cap = int(pltpu.get_tpu_info().vmem_capacity_bytes)
    except Exception:
        vmem_cap = 64 * 1024 * 1024          # conservative fallback (v7x per-TC)
    vmem_limit = min(vmem_cap - 4 * 1024 * 1024,
                     max(32 * 1024 * 1024, int(1.25 * vmem_need)))
    vmem_limit = max(vmem_limit, 16 * 1024 * 1024)
    # TODO(synk): when weight_bytes approaches the per-generation VMEM cap
    # (large hidden_dim, esp. v7x's 64 MiB/TC), switch to a K/N-tiled
    # weight-streaming path (second grid axis / pltpu.emit_pipeline,
    # optionally fp8 weights on v7x) instead of whole-array-resident weights.

    flops = (2 * m * h * (2 * h)             # fused layer 1
             + 2 * (2 * m * h * h)           # layer 2, two heads
             + 2 * (2 * m * h))              # layer 3, two heads
    cost = pl.CostEstimate(
        flops=int(flops),
        transcendentals=0,
        bytes_accessed=int(4 * m * h + weight_bytes + 8 * m),
    )

    x_spec = pl.BlockSpec((tile_m, h), lambda i: (i, 0))
    # Whole-array VMEM operands: DMA'd once, resident across all grid steps.
    wspec = pl.BlockSpec(memory_space=pltpu.MemorySpace.VMEM)
    out_spec = pl.BlockSpec((tile_m, 1), lambda i: (i, 0))

    values_col, q_values_col = pl.pallas_call(
        _critic_kernel,
        out_shape=(
            jax.ShapeDtypeStruct((m, 1), jnp.float32),
            jax.ShapeDtypeStruct((m, 1), jnp.float32),
        ),
        grid_spec=pltpu.PrefetchScalarGridSpec(
            num_scalar_prefetch=0,
            grid=(num_tiles,),
            in_specs=[x_spec] + [wspec] * 10,
            out_specs=[out_spec, out_spec],
        ),
        compiler_params=pltpu.CompilerParams(
            # TODO(synk): for decode-like (tiny-M) calls on v7x megacore,
            # 'parallel' duplicates the weight DMA per core; a head/N split
            # across cores would avoid doubling weight HBM traffic.
            dimension_semantics=("parallel",),
            vmem_limit_bytes=int(vmem_limit),
        ),
        cost_estimate=cost,
    )(
        x,
        prep["w1c"], prep["b1c"],
        prep["w2v"], prep["b2v"],
        prep["w2q"], prep["b2q"],
        prep["w3v"], prep["b3v"],
        prep["w3q"], prep["b3q"],
    )

    values = values_col[:, 0].reshape(b, s)
    q_values = q_values_col[:, 0].reshape(b, s)
    return values, q_values


def init_critic_params(key, hidden_dim):
    """Deterministic synthetic parameters matching nn.Linear shapes.

    Weights stored as (in, out) == PyTorch weight.T; biases stored as (1, out).
    """
    h = hidden_dim
    keys = jax.random.split(key, 12)
    scale = 1.0 / jnp.sqrt(jnp.float32(h))

    def lin(kw, kb, fan_in, fan_out):
        w = jax.random.uniform(kw, (fan_in, fan_out), jnp.float32, -scale, scale)
        bvec = jax.random.uniform(kb, (1, fan_out), jnp.float32, -scale, scale)
        return w, bvec

    p = {}
    p["v_w1"], p["v_b1"] = lin(keys[0], keys[1], h, h)
    p["v_w2"], p["v_b2"] = lin(keys[2], keys[3], h, h)
    p["v_w3"], p["v_b3"] = lin(keys[4], keys[5], h, 1)
    p["q_w1"], p["q_b1"] = lin(keys[6], keys[7], h, h)
    p["q_w2"], p["q_b2"] = lin(keys[8], keys[9], h, h)
    p["q_w3"], p["q_b3"] = lin(keys[10], keys[11], h, 1)
    return p


def _critic_ref(hidden_states, params, matmul_dtype=jnp.float32):
    """Pure-JAX reference. With matmul_dtype=bf16 it mirrors the kernel's
    MXU operand rounding; with f32 it is the exact PyTorch-semantics result."""
    def cast(a):
        return a.astype(matmul_dtype)

    def head(x, w1, b1, w2, b2, w3, b3):
        h1 = jnp.maximum(jnp.dot(cast(x), cast(w1),
                                 preferred_element_type=jnp.float32) + b1, 0.0)
        h2 = jnp.maximum(jnp.dot(cast(h1), cast(w2),
                                 preferred_element_type=jnp.float32) + b2, 0.0)
        return (jnp.dot(cast(h2), cast(w3),
                        preferred_element_type=jnp.float32) + b3)[..., 0]

    v = head(hidden_states, params["v_w1"], params["v_b1"], params["v_w2"],
             params["v_b2"], params["v_w3"], params["v_b3"])
    q = head(hidden_states, params["q_w1"], params["q_b1"], params["q_w2"],
             params["q_b2"], params["q_w3"], params["q_b3"])
    return v, q


if __name__ == "__main__":
    batch, seq_len, hidden_dim = 2, 8, 32

    key = jax.random.PRNGKey(0)
    k_x, k_p = jax.random.split(key)
    hidden_states = jax.random.normal(k_x, (batch, seq_len, hidden_dim), jnp.float32)
    params = init_critic_params(k_p, hidden_dim)
    prep = prepare_critic_params(params)      # one-time weight prep (fuse + bf16)

    fwd = jax.jit(critic_forward)
    values, q_values = fwd(hidden_states, prep)
    jax.block_until_ready((values, q_values))

    assert values.shape == (batch, seq_len)
    assert q_values.shape == (batch, seq_len)

    # bf16-operand-matched reference: tight tolerance.
    v_bf, q_bf = _critic_ref(hidden_states, params, jnp.bfloat16)
    assert jnp.allclose(values, v_bf, atol=1e-3, rtol=1e-3)
    assert jnp.allclose(q_values, q_bf, atol=1e-3, rtol=1e-3)

    # full-f32 reference: loose tolerance (bf16 MXU operand rounding).
    v32, q32 = _critic_ref(hidden_states, params, jnp.float32)
    assert jnp.allclose(values, v32, atol=5e-2, rtol=5e-2)
    assert jnp.allclose(q_values, q32, atol=5e-2, rtol=5e-2)

    print("KERNEL_OK")
</pallas_src>

<mosaic_0001>
module attributes {stable_mosaic.version = 11 : i64} {
  func.func @_critic_kernel(%arg0: i32, %arg1: memref<16x32xf32, #tpu.memory_space<vmem>>, %arg2: memref<32x64xbf16, #tpu.memory_space<vmem>>, %arg3: memref<1x64xf32, #tpu.memory_space<vmem>>, %arg4: memref<32x32xbf16, #tpu.memory_space<vmem>>, %arg5: memref<1x32xf32, #tpu.memory_space<vmem>>, %arg6: memref<32x32xbf16, #tpu.memory_space<vmem>>, %arg7: memref<1x32xf32, #tpu.memory_space<vmem>>, %arg8: memref<32x1xbf16, #tpu.memory_space<vmem>>, %arg9: memref<1x1xf32, #tpu.memory_space<vmem>>, %arg10: memref<32x1xbf16, #tpu.memory_space<vmem>>, %arg11: memref<1x1xf32, #tpu.memory_space<vmem>>, %arg12: memref<16x1xf32, #tpu.memory_space<vmem>>, %arg13: memref<16x1xf32, #tpu.memory_space<vmem>>) attributes {dimension_semantics = [#tpu.dimension_semantics<parallel>], iteration_bounds = array<i64: 1>, scalar_prefetch = 0 : i64, scratch_operands = 0 : i64, tpu.core_type = #tpu.core_type<tc>, window_params = [{transform_indices = @transform_0, window_bounds = array<i64: 16, 32>}, {pipeline_mode = #tpu.pipeline_mode<synchronous>, transform_indices = @transform_1, window_bounds = array<i64: 32, 64>}, {pipeline_mode = #tpu.pipeline_mode<synchronous>, transform_indices = @transform_2, window_bounds = array<i64: 1, 64>}, {pipeline_mode = #tpu.pipeline_mode<synchronous>, transform_indices = @transform_3, window_bounds = array<i64: 32, 32>}, {pipeline_mode = #tpu.pipeline_mode<synchronous>, transform_indices = @transform_4, window_bounds = array<i64: 1, 32>}, {pipeline_mode = #tpu.pipeline_mode<synchronous>, transform_indices = @transform_5, window_bounds = array<i64: 32, 32>}, {pipeline_mode = #tpu.pipeline_mode<synchronous>, transform_indices = @transform_6, window_bounds = array<i64: 1, 32>}, {pipeline_mode = #tpu.pipeline_mode<synchronous>, transform_indices = @transform_7, window_bounds = array<i64: 32, 1>}, {pipeline_mode = #tpu.pipeline_mode<synchronous>, transform_indices = @transform_8, window_bounds = array<i64: 1, 1>}, {pipeline_mode = #tpu.pipeline_mode<synchronous>, transform_indices = @transform_9, window_bounds = array<i64: 32, 1>}, {pipeline_mode = #tpu.pipeline_mode<synchronous>, transform_indices = @transform_10, window_bounds = array<i64: 1, 1>}, {transform_indices = @transform_11, window_bounds = array<i64: 16, 1>}, {transform_indices = @transform_12, window_bounds = array<i64: 16, 1>}]} {
    %c0 = arith.constant 0 : index
    %c0_0 = arith.constant 0 : index
    %0 = vector.load %arg1[%c0, %c0_0] : memref<16x32xf32, #tpu.memory_space<vmem>>, vector<16x32xf32>
    %1 = arith.truncf %0 : vector<16x32xf32> to vector<16x32xbf16>
    %c0_1 = arith.constant 0 : index
    %c0_2 = arith.constant 0 : index
    %2 = vector.load %arg2[%c0_1, %c0_2] : memref<32x64xbf16, #tpu.memory_space<vmem>>, vector<32x64xbf16>
    %cst = arith.constant dense<0.000000e+00> : vector<16x64xf32>
    %3 = tpu.matmul %1, %2, %cst {dimension_numbers = #tpu.dot_dimension_numbers<[1], [0], [0], [1], [0, 0, 1, 1], [], []>} : vector<16x32xbf16>, vector<32x64xbf16>, vector<16x64xf32> -> vector<16x64xf32>
    %c0_3 = arith.constant 0 : index
    %c0_4 = arith.constant 0 : index
    %4 = vector.load %arg3[%c0_3, %c0_4] : memref<1x64xf32, #tpu.memory_space<vmem>>, vector<1x64xf32>
    %5 = vector.broadcast %4 : vector<1x64xf32> to vector<16x64xf32>
    %6 = arith.addf %3, %5 : vector<16x64xf32>
    %cst_5 = arith.constant 0.000000e+00 : f32
    %7 = vector.broadcast %cst_5 : f32 to vector<16x64xf32>
    %8 = arith.maximumf %6, %7 : vector<16x64xf32>
    %9 = arith.truncf %8 : vector<16x64xf32> to vector<16x64xbf16>
    %10 = vector.extract_strided_slice %9 {offsets = [0, 0], sizes = [16, 32], strides = [1, 1]} : vector<16x64xbf16> to vector<16x32xbf16>
    %11 = vector.extract_strided_slice %9 {offsets = [0, 32], sizes = [16, 32], strides = [1, 1]} : vector<16x64xbf16> to vector<16x32xbf16>
    %c0_6 = arith.constant 0 : index
    %c0_7 = arith.constant 0 : index
    %12 = vector.load %arg4[%c0_6, %c0_7] : memref<32x32xbf16, #tpu.memory_space<vmem>>, vector<32x32xbf16>
    %cst_8 = arith.constant dense<0.000000e+00> : vector<16x32xf32>
    %13 = tpu.matmul %10, %12, %cst_8 {dimension_numbers = #tpu.dot_dimension_numbers<[1], [0], [0], [1], [0, 0, 1, 1], [], []>} : vector<16x32xbf16>, vector<32x32xbf16>, vector<16x32xf32> -> vector<16x32xf32>
    %c0_9 = arith.constant 0 : index
    %c0_10 = arith.constant 0 : index
    %14 = vector.load %arg5[%c0_9, %c0_10] : memref<1x32xf32, #tpu.memory_space<vmem>>, vector<1x32xf32>
    %15 = vector.broadcast %14 : vector<1x32xf32> to vector<16x32xf32>
    %16 = arith.addf %13, %15 : vector<16x32xf32>
    %cst_11 = arith.constant 0.000000e+00 : f32
    %17 = vector.broadcast %cst_11 : f32 to vector<16x32xf32>
    %18 = arith.maximumf %16, %17 : vector<16x32xf32>
    %c0_12 = arith.constant 0 : index
    %c0_13 = arith.constant 0 : index
    %19 = vector.load %arg6[%c0_12, %c0_13] : memref<32x32xbf16, #tpu.memory_space<vmem>>, vector<32x32xbf16>
    %cst_14 = arith.constant dense<0.000000e+00> : vector<16x32xf32>
    %20 = tpu.matmul %11, %19, %cst_14 {dimension_numbers = #tpu.dot_dimension_numbers<[1], [0], [0], [1], [0, 0, 1, 1], [], []>} : vector<16x32xbf16>, vector<32x32xbf16>, vector<16x32xf32> -> vector<16x32xf32>
    %c0_15 = arith.constant 0 : index
    %c0_16 = arith.constant 0 : index
    %21 = vector.load %arg7[%c0_15, %c0_16] : memref<1x32xf32, #tpu.memory_space<vmem>>, vector<1x32xf32>
    %22 = vector.broadcast %21 : vector<1x32xf32> to vector<16x32xf32>
    %23 = arith.addf %20, %22 : vector<16x32xf32>
    %cst_17 = arith.constant 0.000000e+00 : f32
    %24 = vector.broadcast %cst_17 : f32 to vector<16x32xf32>
    %25 = arith.maximumf %23, %24 : vector<16x32xf32>
    %26 = arith.truncf %18 : vector<16x32xf32> to vector<16x32xbf16>
    %c0_18 = arith.constant 0 : index
    %c0_19 = arith.constant 0 : index
    %27 = vector.load %arg8[%c0_18, %c0_19] : memref<32x1xbf16, #tpu.memory_space<vmem>>, vector<32x1xbf16>
    %cst_20 = arith.constant dense<0.000000e+00> : vector<16x1xf32>
    %28 = tpu.matmul %26, %27, %cst_20 {dimension_numbers = #tpu.dot_dimension_numbers<[1], [0], [0], [1], [0, 0, 1, 1], [], []>} : vector<16x32xbf16>, vector<32x1xbf16>, vector<16x1xf32> -> vector<16x1xf32>
    %c0_21 = arith.constant 0 : index
    %c0_22 = arith.constant 0 : index
    %29 = vector.load %arg9[%c0_21, %c0_22] : memref<1x1xf32, #tpu.memory_space<vmem>>, vector<1x1xf32>
    %30 = vector.broadcast %29 : vector<1x1xf32> to vector<16x1xf32>
    %31 = arith.addf %28, %30 : vector<16x1xf32>
    %32 = arith.truncf %25 : vector<16x32xf32> to vector<16x32xbf16>
    %c0_23 = arith.constant 0 : index
    %c0_24 = arith.constant 0 : index
    %33 = vector.load %arg10[%c0_23, %c0_24] : memref<32x1xbf16, #tpu.memory_space<vmem>>, vector<32x1xbf16>
    %cst_25 = arith.constant dense<0.000000e+00> : vector<16x1xf32>
    %34 = tpu.matmul %32, %33, %cst_25 {dimension_numbers = #tpu.dot_dimension_numbers<[1], [0], [0], [1], [0, 0, 1, 1], [], []>} : vector<16x32xbf16>, vector<32x1xbf16>, vector<16x1xf32> -> vector<16x1xf32>
    %c0_26 = arith.constant 0 : index
    %c0_27 = arith.constant 0 : index
    %35 = vector.load %arg11[%c0_26, %c0_27] : memref<1x1xf32, #tpu.memory_space<vmem>>, vector<1x1xf32>
    %36 = vector.broadcast %35 : vector<1x1xf32> to vector<16x1xf32>
    %37 = arith.addf %34, %36 : vector<16x1xf32>
    %c0_28 = arith.constant 0 : index
    %c0_29 = arith.constant 0 : index
    %38 = vector.load %arg12[%c0_28, %c0_29] : memref<16x1xf32, #tpu.memory_space<vmem>>, vector<16x1xf32>
    tpu.vector_store %arg12[%c0_28, %c0_29], %31 {strides = array<i32>} : memref<16x1xf32, #tpu.memory_space<vmem>>, vector<16x1xf32>,
    %c0_30 = arith.constant 0 : index
    %c0_31 = arith.constant 0 : index
    %39 = vector.load %arg13[%c0_30, %c0_31] : memref<16x1xf32, #tpu.memory_space<vmem>>, vector<16x1xf32>
    tpu.vector_store %arg13[%c0_30, %c0_31], %37 {strides = array<i32>} : memref<16x1xf32, #tpu.memory_space<vmem>>, vector<16x1xf32>,
    return
  }
  func.func @transform_0(%arg0: i32) -> (i32, i32) {
    %c0_i32 = arith.constant 0 : i32
    %c0_i32_0 = arith.constant 0 : i32
    return %arg0, %c0_i32 : i32, i32
  }
  func.func @transform_1(%arg0: i32) -> (i32, i32) {
    %c0_i32 = arith.constant 0 : i32
    %c0_i32_0 = arith.constant 0 : i32
    %c0_i32_1 = arith.constant 0 : i32
    return %c0_i32, %c0_i32_0 : i32, i32
  }
  func.func @transform_2(%arg0: i32) -> (i32, i32) {
    %c0_i32 = arith.constant 0 : i32
    %c0_i32_0 = arith.constant 0 : i32
    %c0_i32_1 = arith.constant 0 : i32
    return %c0_i32, %c0_i32_0 : i32, i32
  }
  func.func @transform_3(%arg0: i32) -> (i32, i32) {
    %c0_i32 = arith.constant 0 : i32
    %c0_i32_0 = arith.constant 0 : i32
    %c0_i32_1 = arith.constant 0 : i32
    return %c0_i32, %c0_i32_0 : i32, i32
  }
  func.func @transform_4(%arg0: i32) -> (i32, i32) {
    %c0_i32 = arith.constant 0 : i32
    %c0_i32_0 = arith.constant 0 : i32
    %c0_i32_1 = arith.constant 0 : i32
    return %c0_i32, %c0_i32_0 : i32, i32
  }
  func.func @transform_5(%arg0: i32) -> (i32, i32) {
    %c0_i32 = arith.constant 0 : i32
    %c0_i32_0 = arith.constant 0 : i32
    %c0_i32_1 = arith.constant 0 : i32
    return %c0_i32, %c0_i32_0 : i32, i32
  }
  func.func @transform_6(%arg0: i32) -> (i32, i32) {
    %c0_i32 = arith.constant 0 : i32
    %c0_i32_0 = arith.constant 0 : i32
    %c0_i32_1 = arith.constant 0 : i32
    return %c0_i32, %c0_i32_0 : i32, i32
  }
  func.func @transform_7(%arg0: i32) -> (i32, i32) {
    %c0_i32 = arith.constant 0 : i32
    %c0_i32_0 = arith.constant 0 : i32
    %c0_i32_1 = arith.constant 0 : i32
    return %c0_i32, %c0_i32_0 : i32, i32
  }
  func.func @transform_8(%arg0: i32) -> (i32, i32) {
    %c0_i32 = arith.constant 0 : i32
    %c0_i32_0 = arith.constant 0 : i32
    %c0_i32_1 = arith.constant 0 : i32
    return %c0_i32, %c0_i32_0 : i32, i32
  }
  func.func @transform_9(%arg0: i32) -> (i32, i32) {
    %c0_i32 = arith.constant 0 : i32
    %c0_i32_0 = arith.constant 0 : i32
    %c0_i32_1 = arith.constant 0 : i32
    return %c0_i32, %c0_i32_0 : i32, i32
  }
  func.func @transform_10(%arg0: i32) -> (i32, i32) {
    %c0_i32 = arith.constant 0 : i32
    %c0_i32_0 = arith.constant 0 : i32
    %c0_i32_1 = arith.constant 0 : i32
    return %c0_i32, %c0_i32_0 : i32, i32
  }
  func.func @transform_11(%arg0: i32) -> (i32, i32) {
    %c0_i32 = arith.constant 0 : i32
    %c0_i32_0 = arith.constant 0 : i32
    return %arg0, %c0_i32 : i32, i32
  }
  func.func @transform_12(%arg0: i32) -> (i32, i32) {
    %c0_i32 = arith.constant 0 : i32
    %c0_i32_0 = arith.constant 0 : i32
    return %arg0, %c0_i32 : i32, i32
  }
}

</mosaic_0001>

<llo_original>
// kernel: squeeze.3
$region0: #{squeeze.3}
  %s0 = inlined_call_operand.vmem [shape: f32[16], index: 0, kind: input, shape index: {}]
  %s1 = inlined_call_operand.hbm [shape: f32[2,8], index: 1, kind: output, shape index: {}]
  $region1: #{squeeze.3} parent=0
    #allocation0 [shape = 'u8[1024]{0}', space=vmem, size = 0x400, scoped, tag = 'operand span for operand 1']
    #allocation1 [shape = 's32[1]{0}', space=sflag, size = 0x4, scoped, tag = 'scoped memory for squeeze.3']
    #allocation2 [shape = 'u8[4096]{0}', space=vmem, size = 0x1000, scoped, tag = 'scoped mem for output reshape']
    #allocation3 [shape = 'u8[4096]{0}', space=vmem, size = 0x1000, scoped, tag = 'scoped mem for input reshape']
    %2 = vsyncpa [#allocation1], 0
    %s4 = sshllo.u32 0, 1
    %v5 = vld [vmem:[%s0] sm:%s4]
    %6 = vst [vmem:[#allocation3] sm:%s4] %v5
    %v7 = vld [vmem:[#allocation3] sm:$0x1]
    %vm8 = vcmask 64512
    %9 = vst.msk [vmem:[#allocation2] sm:$0x1] %vm8, %v7
    %v10 = vld [vmem:[#allocation3] sm:$0x1]
    %11 = vrot.lane.b32.xlu0 %v10, 120
    %v12 = vpop.permute.xlu0 %11
    %vm13 = vcmask 64512
    %s14 = scalar_lea.vmem [#allocation2], 1
    %15 = vst.msk [vmem:[%s14] sm:$0x1] %vm13, %v12
    %s17 = sshllo.u32 0, 2
    %v19 = vld [vmem:[#allocation2] sm:%s17]
    %s20 = sshllo.u32 0, 2
    %21 = vst [vmem:[#allocation0] sm:%s20] %v19
    %s23 = ssub.s32 32, 32
    %24 = vsyncadd [#allocation1], %s23
    %s26 = sshll.u32 [#allocation0], 4
    %s27 = int_to_ptr.vmem [resolvable:$true] %s26
    %29 = dma.vmem_to_hbm [thread:$0]  %s27, 32, %s1, [#allocation1]
    %30 = dma.done [#allocation1], 32
    %31 = vsyncpa [#allocation1], 1

// kernel: critic_forward.1
$region0: #{critic_forward.1}
  #allocation0 [shape = 'u32[]', space=smem, size = 0x4, offset = 0x4, fixed_abs, tag = 'smem constant byte address 0x4 - core index']
  #allocation1 [shape = 'u32[144,128]{1,0:T(1,128)}', space=vmem, size = 0x12000, scoped, tag = 'internal scratch']
  #allocation2 [shape = 'f32[1,1]{1,0:T(1,128)S(1)}', space=vmem, size = 0x200, scoped, tag = 'scoped memory for critic_forward.1']
  #allocation3 [shape = 'f32[1,1]{1,0:T(1,128)S(1)}', space=vmem, size = 0x200, scoped, tag = 'scoped memory for critic_forward.1']
  %s0 = inlined_call_operand.vmem [shape: f32[16,32], index: 0, kind: input, shape index: {}]
  %s1 = inlined_call_operand.vmem [shape: bf16[32,64], index: 1, kind: input, shape index: {}]
  %s2 = inlined_call_operand.hbm [shape: f32[1,64], index: 2, kind: input, shape index: {}]
  %s3 = inlined_call_operand.vmem [shape: bf16[32,32], index: 3, kind: input, shape index: {}]
  %s4 = inlined_call_operand.hbm [shape: f32[1,32], index: 4, kind: input, shape index: {}]
  %s5 = inlined_call_operand.vmem [shape: bf16[32,32], index: 5, kind: input, shape index: {}]
  %s6 = inlined_call_operand.hbm [shape: f32[1,32], index: 6, kind: input, shape index: {}]
  %s7 = inlined_call_operand.vmem [shape: bf16[32,1], index: 7, kind: input, shape index: {}]
  %s8 = inlined_call_operand.<no memory space> [shape: f32[1,1], index: 8, kind: input, shape index: {}]
  %s9 = inlined_call_operand.vmem [shape: bf16[32,1], index: 9, kind: input, shape index: {}]
  %s10 = inlined_call_operand.<no memory space> [shape: f32[1,1], index: 10, kind: input, shape index: {}]
  %s11 = inlined_call_operand.vmem [shape: f32[16,1], index: 11, kind: output, shape index: {0}]
  %s12 = inlined_call_operand.vmem [shape: f32[16,1], index: 12, kind: output, shape index: {1}]
  %13 = xla_tuple %s11, %s12
  %s14 = sld [smem:[#allocation0]]
  $region74: #{critic_forward.1} parent=0
    _
  %s16 = ssub.s32 1, %s14
  %s17 = scalar_select 0, %s16, %s14
  %v18 = vstv %s8
  %19 = vst [vmem:[#allocation2] sm:$0x1] %v18
  %v20 = vstv %s10
  %21 = vst [vmem:[#allocation3] sm:$0x1] %v20
  $region1: #{critic_forward.1} parent=0
    #allocation4 [shape = 'u8[512]{0}', space=vmem, size = 0x400, scoped, tag = 'input window, operand 2, single buffered']
    #allocation5 [shape = 's32[1]{0}', space=sflag, size = 0x4, scoped, tag = 'scoped memory for critic_forward.1']
    #allocation6 [shape = 'u8[512]{0}', space=vmem, size = 0x400, scoped, tag = 'input window, operand 4, single buffered']
    #allocation7 [shape = 's32[1]{0}', space=sflag, size = 0x4, scoped, tag = 'scoped memory for critic_forward.1']
    #allocation8 [shape = 'u8[512]{0}', space=vmem, size = 0x400, scoped, tag = 'input window, operand 6, single buffered']
    %22 = vsyncpa [#allocation5], 0
    %23 = vsyncpa [#allocation7], 0
    // Predicated region
    $region2: #{critic_forward.1} parent=1 // pred_check
      _
    $region3: #{critic_forward.1} parent=1 // pred_check_branch
      %25 = sbr.rel (0) target = $region5
    $region4: #{critic_forward.1} parent=1 // pred_region
      _
    $region5: #{critic_forward.1} parent=1 // pred_fallthru
      _
    // Predicated region
    $region6: #{critic_forward.1} parent=1 // pred_check
      _
    $region7: #{critic_forward.1} parent=1 // pred_check_branch
      %27 = sbr.rel (0) target = $region9
    $region8: #{critic_forward.1} parent=1 // pred_region
      _
    $region9: #{critic_forward.1} parent=1 // pred_fallthru
      _
    // Predicated region
    $region10: #{critic_forward.1} parent=1 // pred_check
      _
    $region11: #{critic_forward.1} parent=1 // pred_check_branch
      %29 = sbr.rel (0) target = $region13
    $region12: #{critic_forward.1} parent=1 // pred_region
      %s31 = ssub.s32 16, 16
      %32 = vsyncadd [#allocation5], %s31
      %s34 = sshll.u32 [#allocation4], 4
      %s35 = int_to_ptr.vmem [resolvable:$true] %s34
      %37 = dma.hbm_to_vmem [thread:$0]  %s2, 16, %s35, [#allocation5]
    $region13: #{critic_forward.1} parent=1 // pred_fallthru
      _
    // Predicated region
    $region14: #{critic_forward.1} parent=1 // pred_check
      _
    $region15: #{critic_forward.1} parent=1 // pred_check_branch
      %39 = sbr.rel (0) target = $region17
    $region16: #{critic_forward.1} parent=1 // pred_region
      _
    $region17: #{critic_forward.1} parent=1 // pred_fallthru
      _
    // Predicated region
    $region18: #{critic_forward.1} parent=1 // pred_check
      _
    $region19: #{critic_forward.1} parent=1 // pred_check_branch
      %41 = sbr.rel (0) target = $region21
    $region20: #{critic_forward.1} parent=1 // pred_region
      %s43 = ssub.s32 16, 16
      %44 = vsyncadd [#allocation7], %s43
      %s46 = sshll.u32 [#allocation6], 4
      %s47 = int_to_ptr.vmem [resolvable:$true] %s46
      %49 = dma.hbm_to_vmem [thread:$0]  %s4, 16, %s47, [#allocation7]
    $region21: #{critic_forward.1} parent=1 // pred_fallthru
      _
    // Predicated region
    $region22: #{critic_forward.1} parent=1 // pred_check
      _
    $region23: #{critic_forward.1} parent=1 // pred_check_branch
      %51 = sbr.rel (0) target = $region25
    $region24: #{critic_forward.1} parent=1 // pred_region
      _
    $region25: #{critic_forward.1} parent=1 // pred_fallthru
      _
    // Predicated region
    $region26: #{critic_forward.1} parent=1 // pred_check
      _
    $region27: #{critic_forward.1} parent=1 // pred_check_branch
      %53 = sbr.rel (0) target = $region29
    $region28: #{critic_forward.1} parent=1 // pred_region
      %s55 = ssub.s32 16, 16
      %56 = vsyncadd [#allocation7], %s55
      %s58 = sshll.u32 [#allocation8], 4
      %s59 = int_to_ptr.vmem [resolvable:$true] %s58
      %61 = dma.hbm_to_vmem [thread:$0]  %s6, 16, %s59, [#allocation7]
    $region29: #{critic_forward.1} parent=1 // pred_fallthru
      _
    // Predicated region
    $region30: #{critic_forward.1} parent=1 // pred_check
      _
    $region31: #{critic_forward.1} parent=1 // pred_check_branch
      %63 = sbr.rel (0) target = $region33
    $region32: #{critic_forward.1} parent=1 // pred_region
      _
    $region33: #{critic_forward.1} parent=1 // pred_fallthru
      _
    // Predicated region
    $region34: #{critic_forward.1} parent=1 // pred_check
      _
    $region35: #{critic_forward.1} parent=1 // pred_check_branch
      %65 = sbr.rel (0) target = $region37
    $region36: #{critic_forward.1} parent=1 // pred_region
      _
    $region37: #{critic_forward.1} parent=1 // pred_fallthru
      _
    // Predicated region
    $region38: #{critic_forward.1} parent=1 // pred_check
      _
    $region39: #{critic_forward.1} parent=1 // pred_check_branch
      %67 = sbr.rel (0) target = $region41
    $region40: #{critic_forward.1} parent=1 // pred_region
      _
    $region41: #{critic_forward.1} parent=1 // pred_fallthru
      _
    // Predicated region
    $region42: #{critic_forward.1} parent=1 // pred_check
      _
    $region43: #{critic_forward.1} parent=1 // pred_check_branch
      %69 = sbr.rel (0) target = $region45
    $region44: #{critic_forward.1} parent=1 // pred_region
      _
    $region45: #{critic_forward.1} parent=1 // pred_fallthru
      _
    // Predicated region
    $region46: #{critic_forward.1} parent=1 // pred_check
      _
    $region47: #{critic_forward.1} parent=1 // pred_check_branch
      %71 = sbr.rel (0) target = $region49
    $region48: #{critic_forward.1} parent=1 // pred_region
      %72 = dma.done [#allocation5], 16
    $region49: #{critic_forward.1} parent=1 // pred_fallthru
      _
    // Predicated region
    $region50: #{critic_forward.1} parent=1 // pred_check
      _
    $region51: #{critic_forward.1} parent=1 // pred_check_branch
      %74 = sbr.rel (0) target = $region53
    $region52: #{critic_forward.1} parent=1 // pred_region
      %75 = dma.done [#allocation7], 16
    $region53: #{critic_forward.1} parent=1 // pred_fallthru
      _
    // Predicated region
    $region54: #{critic_forward.1} parent=1 // pred_check
      _
    $region55: #{critic_forward.1} parent=1 // pred_check_branch
      %77 = sbr.rel (0) target = $region57
    $region56: #{critic_forward.1} parent=1 // pred_region
      %78 = dma.done [#allocation7], 16
    $region57: #{critic_forward.1} parent=1 // pred_fallthru
      _
    %v80 = vld [vmem:[%s0] sm:$0xff]
    %v81 = vld [vmem:[%s0 + $0x8] sm:$0xff]
    %v82 = vpack.c.bf16 %v81, %v80
    %v83 = vld [vmem:[%s1] sm:$0xf]
    %v84 = vld [vmem:[%s1 + $0x4] sm:$0xf]
    %v85 = vld [vmem:[%s1 + $0x8] sm:$0xf]
    %v86 = vld [vmem:[%s1 + $0xc] sm:$0xf]
    %v87 = vld [vmem:[#allocation4] sm:$0x1]
    %v89 = vlaneseq
    %v90 = vshrl.u32 %v89, 7
    %v91 = vsub.s32 0, %v90
    %v92 = vrot.slane %v87, %v91
    %v98 = vunpack.c.l.b16 %v83
    %v99 = vunpack.c.l.b16 %v84
    %v100 = vunpack.c.l.b16 %v85
    %v101 = vunpack.c.l.b16 %v86
    %v102 = vpack.c.b16 %v99, %v98
    %v103 = vpack.c.b16 %v101, %v100
    %vm106 = vcmask 261120
    %v108 = vsel %vm106, %v82, 0
    %110 = vmatprep.subr.bf16.mxu0 0
    %111 = vmatpush1.bf16.msra.mxu0 %v102
    %112 = vmatprep.subr.bf16.mxu0 0
    %113 = vmatpush1.bf16.msra.mxu0 %v103
    %114 = vmatprep.subr.bf16.mxu0 0
    %115 = vmatpush1.bf16.msra.mxu0 0
    %116 = vmatprep.subr.bf16.mxu0 0
    %117 = vmatpush1.bf16.msra.mxu0 0
    %118 = vmatprep.subr.bf16.mxu0 0
    %119 = vmatpush1.bf16.msra.mxu0 0
    %120 = vmatprep.subr.bf16.mxu0 0
    %121 = vmatpush1.bf16.msra.mxu0 0
    %122 = vmatprep.subr.bf16.mxu0 0
    %123 = vmatpush1.bf16.msra.mxu0 0
    %124 = vmatprep.subr.bf16.mxu0 0
    %125 = vmatpush1.bf16.msra.mxu0 0
    %126 = vmatprep.subr.bf16.mxu0 0
    %127 = vmatpush1.bf16.msra.mxu0 0
    %128 = vmatprep.subr.bf16.mxu0 0
    %129 = vmatpush1.bf16.msra.mxu0 0
    %130 = vmatprep.subr.bf16.mxu0 0
    %131 = vmatpush1.bf16.msra.mxu0 0
    %132 = vmatprep.subr.bf16.mxu0 0
    %133 = vmatpush1.bf16.msra.mxu0 0
    %134 = vmatprep.subr.bf16.mxu0 0
    %135 = vmatpush1.bf16.msra.mxu0 0
    %136 = vmatprep.subr.bf16.mxu0 0
    %137 = vmatpush1.bf16.msra.mxu0 0
    %138 = vmatprep.subr.bf16.mxu0 0
    %139 = vmatpush1.bf16.msra.mxu0 0
    %140 = vmatprep.subr.bf16.mxu0 0
    %141 = vmatpush1.bf16.msra.mxu0 0
    %142 = vmatprep.mubr.bf16.mxu0 0
    %143 = vmatmul.mubr.bf16.gmra.mrb[0].mxu0 %v108
    %v144 = vpop.f32.mrb[0].mxu0
    %v145 = vadd.f32 %v92, %v144
    %v146 = vpop.f32.mrb[0].mxu0
    %v147 = vpop.f32.mrb[0].mxu0
    %v148 = vadd.f32 %v92, %v147
    %v149 = vpop.f32.mrb[0].mxu0
    %150 = vdwg.mxu0
    %v151 = vmax.f32 %v145, 0.0
    %v152 = vmax.f32 %v148, 0.0
    %v153 = vpack.c.bf16 %v152, %v151
    %v154 = vld [vmem:[%s3] sm:$0xf]
    %v155 = vld [vmem:[%s3 + $0x4] sm:$0xf]
    %v156 = vld [vmem:[%s3 + $0x8] sm:$0xf]
    %v157 = vld [vmem:[%s3 + $0xc] sm:$0xf]
    %v158 = vld [vmem:[#allocation6] sm:$0x1]
    %v160 = vlaneseq
    %v161 = vshrl.u32 %v160, 7
    %v162 = vsub.s32 0, %v161
    %v163 = vrot.slane %v158, %v162
    %v169 = vunpack.c.l.b16 %v154
    %v170 = vunpack.c.l.b16 %v155
    %v171 = vunpack.c.l.b16 %v156
    %v172 = vunpack.c.l.b16 %v157
    %v173 = vpack.c.b16 %v170, %v169
    %v174 = vpack.c.b16 %v172, %v171
    %v178 = vsel %vm106, %v153, 0
    %180 = vmatprep.subr.bf16.mxu0 0
    %181 = vmatpush1.bf16.msra.mxu0 %v173
    %182 = vmatprep.subr.bf16.mxu0 0
    %183 = vmatpush1.bf16.msra.mxu0 %v174
    %184 = vmatprep.subr.bf16.mxu0 0
    %185 = vmatpush1.bf16.msra.mxu0 0
    %186 = vmatprep.subr.bf16.mxu0 0
    %187 = vmatpush1.bf16.msra.mxu0 0
    %188 = vmatprep.subr.bf16.mxu0 0
    %189 = vmatpush1.bf16.msra.mxu0 0
    %190 = vmatprep.subr.bf16.mxu0 0
    %191 = vmatpush1.bf16.msra.mxu0 0
    %192 = vmatprep.subr.bf16.mxu0 0
    %193 = vmatpush1.bf16.msra.mxu0 0
    %194 = vmatprep.subr.bf16.mxu0 0
    %195 = vmatpush1.bf16.msra.mxu0 0
    %196 = vmatprep.subr.bf16.mxu0 0
    %197 = vmatpush1.bf16.msra.mxu0 0
    %198 = vmatprep.subr.bf16.mxu0 0
    %199 = vmatpush1.bf16.msra.mxu0 0
    %200 = vmatprep.subr.bf16.mxu0 0
    %201 = vmatpush1.bf16.msra.mxu0 0
    %202 = vmatprep.subr.bf16.mxu0 0
    %203 = vmatpush1.bf16.msra.mxu0 0
    %204 = vmatprep.subr.bf16.mxu0 0
    %205 = vmatpush1.bf16.msra.mxu0 0
    %206 = vmatprep.subr.bf16.mxu0 0
    %207 = vmatpush1.bf16.msra.mxu0 0
    %208 = vmatprep.subr.bf16.mxu0 0
    %209 = vmatpush1.bf16.msra.mxu0 0
    %210 = vmatprep.subr.bf16.mxu0 0
    %211 = vmatpush1.bf16.msra.mxu0 0
    %212 = vmatprep.mubr.bf16.mxu0 0
    %213 = vmatmul.mubr.bf16.gmra.mrb[0].mxu0 %v178
    %v214 = vpop.f32.mrb[0].mxu0
    %v215 = vadd.f32 %v163, %v214
    %v216 = vpop.f32.mrb[0].mxu0
    %v217 = vpop.f32.mrb[0].mxu0
    %v218 = vadd.f32 %v163, %v217
    %v219 = vpop.f32.mrb[0].mxu0
    %220 = vdwg.mxu0
    %v221 = vmax.f32 %v215, 0.0
    %v222 = vmax.f32 %v218, 0.0
    %v223 = vld [vmem:[%s5] sm:$0xf]
    %v224 = vld [vmem:[%s5 + $0x4] sm:$0xf]
    %v225 = vld [vmem:[%s5 + $0x8] sm:$0xf]
    %v226 = vld [vmem:[%s5 + $0xc] sm:$0xf]
    %v227 = vld [vmem:[#allocation8] sm:$0x1]
    %v229 = vlaneseq
    %v230 = vshrl.u32 %v229, 7
    %v231 = vsub.s32 0, %v230
    %v232 = vrot.slane %v227, %v231
    %235 = vrot.lane.b32.xlu0 %v153, 96
    %v236 = vpop.permute.xlu0 %235
    %v241 = vunpack.c.l.b16 %v223
    %v242 = vunpack.c.l.b16 %v224
    %v243 = vunpack.c.l.b16 %v225
    %v244 = vunpack.c.l.b16 %v226
    %v245 = vpack.c.b16 %v242, %v241
    %v246 = vpack.c.b16 %v244, %v243
    %v250 = vsel %vm106, %v236, 0
    %252 = vmatprep.subr.bf16.mxu0 0
    %253 = vmatpush1.bf16.msra.mxu0 %v245
    %254 = vmatprep.subr.bf16.mxu0 0
    %255 = vmatpush1.bf16.msra.mxu0 %v246
    %256 = vmatprep.subr.bf16.mxu0 0
    %257 = vmatpush1.bf16.msra.mxu0 0
    %258 = vmatprep.subr.bf16.mxu0 0
    %259 = vmatpush1.bf16.msra.mxu0 0
    %260 = vmatprep.subr.bf16.mxu0 0
    %261 = vmatpush1.bf16.msra.mxu0 0
    %262 = vmatprep.subr.bf16.mxu0 0
    %263 = vmatpush1.bf16.msra.mxu0 0
    %264 = vmatprep.subr.bf16.mxu0 0
    %265 = vmatpush1.bf16.msra.mxu0 0
    %266 = vmatprep.subr.bf16.mxu0 0
    %267 = vmatpush1.bf16.msra.mxu0 0
    %268 = vmatprep.subr.bf16.mxu0 0
    %269 = vmatpush1.bf16.msra.mxu0 0
    %270 = vmatprep.subr.bf16.mxu0 0
    %271 = vmatpush1.bf16.msra.mxu0 0
    %272 = vmatprep.subr.bf16.mxu0 0
    %273 = vmatpush1.bf16.msra.mxu0 0
    %274 = vmatprep.subr.bf16.mxu0 0
    %275 = vmatpush1.bf16.msra.mxu0 0
    %276 = vmatprep.subr.bf16.mxu0 0
    %277 = vmatpush1.bf16.msra.mxu0 0
    %278 = vmatprep.subr.bf16.mxu0 0
    %279 = vmatpush1.bf16.msra.mxu0 0
    %280 = vmatprep.subr.bf16.mxu0 0
    %281 = vmatpush1.bf16.msra.mxu0 0
    %282 = vmatprep.subr.bf16.mxu0 0
    %283 = vmatpush1.bf16.msra.mxu0 0
    %284 = vmatprep.mubr.bf16.mxu0 0
    %285 = vmatmul.mubr.bf16.gmra.mrb[0].mxu0 %v250
    %v286 = vpop.f32.mrb[0].mxu0
    %v287 = vadd.f32 %v232, %v286
    %v288 = vpop.f32.mrb[0].mxu0
    %v289 = vpop.f32.mrb[0].mxu0
    %v290 = vadd.f32 %v232, %v289
    %v291 = vpop.f32.mrb[0].mxu0
    %292 = vdwg.mxu0
    %v293 = vmax.f32 %v287, 0.0
    %v294 = vmax.f32 %v290, 0.0
    %v295 = vpack.c.bf16 %v222, %v221
    %v296 = vld [vmem:[%s7] sm:$0xf]
    %v297 = vld [vmem:[%s7 + $0x4] sm:$0xf]
    %v298 = vld [vmem:[%s7 + $0x8] sm:$0xf]
    %v299 = vld [vmem:[%s7 + $0xc] sm:$0xf]
    %v300 = vld [vmem:[#allocation2] sm:$0x1]
    %v302 = vlaneseq
    %v303 = vshrl.u32 %v302, 7
    %v304 = vsub.s32 0, %v303
    %v305 = vrot.slane %v300, %v304
    %v311 = vunpack.c.l.b16 %v296
    %v312 = vunpack.c.l.b16 %v297
    %v313 = vunpack.c.l.b16 %v298
    %v314 = vunpack.c.l.b16 %v299
    %v315 = vpack.c.b16 %v312, %v311
    %v316 = vpack.c.b16 %v314, %v313
    %v320 = vsel %vm106, %v295, 0
    %322 = vmatprep.subr.bf16.mxu0 0
    %323 = vmatpush1.bf16.msra.mxu0 %v315
    %324 = vmatprep.subr.bf16.mxu0 0
    %325 = vmatpush1.bf16.msra.mxu0 %v316
    %326 = vmatprep.subr.bf16.mxu0 0
    %327 = vmatpush1.bf16.msra.mxu0 0
    %328 = vmatprep.subr.bf16.mxu0 0
    %329 = vmatpush1.bf16.msra.mxu0 0
    %330 = vmatprep.subr.bf16.mxu0 0
    %331 = vmatpush1.bf16.msra.mxu0 0
    %332 = vmatprep.subr.bf16.mxu0 0
    %333 = vmatpush1.bf16.msra.mxu0 0
    %334 = vmatprep.subr.bf16.mxu0 0
    %335 = vmatpush1.bf16.msra.mxu0 0
    %336 = vmatprep.subr.bf16.mxu0 0
    %337 = vmatpush1.bf16.msra.mxu0 0
    %338 = vmatprep.subr.bf16.mxu0 0
    %339 = vmatpush1.bf16.msra.mxu0 0
    %340 = vmatprep.subr.bf16.mxu0 0
    %341 = vmatpush1.bf16.msra.mxu0 0
    %342 = vmatprep.subr.bf16.mxu0 0
    %343 = vmatpush1.bf16.msra.mxu0 0
    %344 = vmatprep.subr.bf16.mxu0 0
    %345 = vmatpush1.bf16.msra.mxu0 0
    %346 = vmatprep.subr.bf16.mxu0 0
    %347 = vmatpush1.bf16.msra.mxu0 0
    %348 = vmatprep.subr.bf16.mxu0 0
    %349 = vmatpush1.bf16.msra.mxu0 0
    %350 = vmatprep.subr.bf16.mxu0 0
    %351 = vmatpush1.bf16.msra.mxu0 0
    %352 = vmatprep.subr.bf16.mxu0 0
    %353 = vmatpush1.bf16.msra.mxu0 0
    %354 = vmatprep.mubr.bf16.mxu0 0
    %355 = vmatmul.mubr.bf16.gmra.mrb[0].mxu0 %v320
    %v356 = vpop.f32.mrb[0].mxu0
    %v357 = vadd.f32 %v305, %v356
    %v358 = vpop.f32.mrb[0].mxu0
    %v359 = vpop.f32.mrb[0].mxu0
    %v360 = vadd.f32 %v305, %v359
    %v361 = vpop.f32.mrb[0].mxu0
    %362 = vdwg.mxu0
    %v363 = vpack.c.bf16 %v294, %v293
    %v364 = vld [vmem:[%s9] sm:$0xf]
    %v365 = vld [vmem:[%s9 + $0x4] sm:$0xf]
    %v366 = vld [vmem:[%s9 + $0x8] sm:$0xf]
    %v367 = vld [vmem:[%s9 + $0xc] sm:$0xf]
    %v368 = vld [vmem:[#allocation3] sm:$0x1]
    %v370 = vlaneseq
    %v371 = vshrl.u32 %v370, 7
    %v372 = vsub.s32 0, %v371
    %v373 = vrot.slane %v368, %v372
    %v379 = vunpack.c.l.b16 %v364
    %v380 = vunpack.c.l.b16 %v365
    %v381 = vunpack.c.l.b16 %v366
    %v382 = vunpack.c.l.b16 %v367
    %v383 = vpack.c.b16 %v380, %v379
    %v384 = vpack.c.b16 %v382, %v381
    %v388 = vsel %vm106, %v363, 0
    %390 = vmatprep.subr.bf16.mxu0 0
    %391 = vmatpush1.bf16.msra.mxu0 %v383
    %392 = vmatprep.subr.bf16.mxu0 0
    %393 = vmatpush1.bf16.msra.mxu0 %v384
    %394 = vmatprep.subr.bf16.mxu0 0
    %395 = vmatpush1.bf16.msra.mxu0 0
    %396 = vmatprep.subr.bf16.mxu0 0
    %397 = vmatpush1.bf16.msra.mxu0 0
    %398 = vmatprep.subr.bf16.mxu0 0
    %399 = vmatpush1.bf16.msra.mxu0 0
    %400 = vmatprep.subr.bf16.mxu0 0
    %401 = vmatpush1.bf16.msra.mxu0 0
    %402 = vmatprep.subr.bf16.mxu0 0
    %403 = vmatpush1.bf16.msra.mxu0 0
    %404 = vmatprep.subr.bf16.mxu0 0
    %405 = vmatpush1.bf16.msra.mxu0 0
    %406 = vmatprep.subr.bf16.mxu0 0
    %407 = vmatpush1.bf16.msra.mxu0 0
    %408 = vmatprep.subr.bf16.mxu0 0
    %409 = vmatpush1.bf16.msra.mxu0 0
    %410 = vmatprep.subr.bf16.mxu0 0
    %411 = vmatpush1.bf16.msra.mxu0 0
    %412 = vmatprep.subr.bf16.mxu0 0
    %413 = vmatpush1.bf16.msra.mxu0 0
    %414 = vmatprep.subr.bf16.mxu0 0
    %415 = vmatpush1.bf16.msra.mxu0 0
    %416 = vmatprep.subr.bf16.mxu0 0
    %417 = vmatpush1.bf16.msra.mxu0 0
    %418 = vmatprep.subr.bf16.mxu0 0
    %419 = vmatpush1.bf16.msra.mxu0 0
    %420 = vmatprep.subr.bf16.mxu0 0
    %421 = vmatpush1.bf16.msra.mxu0 0
    %422 = vmatprep.mubr.bf16.mxu0 0
    %423 = vmatmul.mubr.bf16.gmra.mrb[0].mxu0 %v388
    %v424 = vpop.f32.mrb[0].mxu0
    %v425 = vadd.f32 %v373, %v424
    %v426 = vpop.f32.mrb[0].mxu0
    %v427 = vpop.f32.mrb[0].mxu0
    %v428 = vadd.f32 %v373, %v427
    %v429 = vpop.f32.mrb[0].mxu0
    %430 = vdwg.mxu0
    %vm431 = vcmask 7168
    %432 = vst.msk [vmem:[%s11] sm:$0xff] %vm431, %v357
    %433 = vst.msk [vmem:[%s11 + $0x8] sm:$0xff] %vm431, %v360
    %434 = vst.msk [vmem:[%s12] sm:$0xff] %vm431, %v425
    %435 = vst.msk [vmem:[%s12 + $0x8] sm:$0xff] %vm431, %v428
    // Predicated region
    $region58: #{critic_forward.1} parent=1 // pred_check
      _
    $region59: #{critic_forward.1} parent=1 // pred_check_branch
      %437 = sbr.rel (0) target = $region61
    $region60: #{critic_forward.1} parent=1 // pred_region
      _
    $region61: #{critic_forward.1} parent=1 // pred_fallthru
      _
    // Predicated region
    $region62: #{critic_forward.1} parent=1 // pred_check
      _
    $region63: #{critic_forward.1} parent=1 // pred_check_branch
      %439 = sbr.rel (0) target = $region65
    $region64: #{critic_forward.1} parent=1 // pred_region
      _
    $region65: #{critic_forward.1} parent=1 // pred_fallthru
      _
    // Predicated region
    $region66: #{critic_forward.1} parent=1 // pred_check
      _
    $region67: #{critic_forward.1} parent=1 // pred_check_branch
      %441 = sbr.rel (0) target = $region69
    $region68: #{critic_forward.1} parent=1 // pred_region
      _
    $region69: #{critic_forward.1} parent=1 // pred_fallthru
      _
    // Predicated region
    $region70: #{critic_forward.1} parent=1 // pred_check
      _
    $region71: #{critic_forward.1} parent=1 // pred_check_branch
      %443 = sbr.rel (0) target = $region73
    $region72: #{critic_forward.1} parent=1 // pred_region
      _
    $region73: #{critic_forward.1} parent=1 // pred_fallthru
      _
    %444 = vsyncpa [#allocation5], 1
    %445 = vsyncpa [#allocation7], 1

</llo_original>
